<compile_context>
chip_gen: v7x
topology: tpu7x:2x2x1
jax: 0.10.0
libtpu: 0.0.40
codegen_flags: <defaults>
</compile_context>

<pallas_src>
import jax
import jax.numpy as jnp
from jax.experimental import pallas as pl
from jax.experimental.pallas import tpu as pltpu

IN_FEATURES = 28 * 28   # 784
HIDDEN = 256
N_CLASSES = 10
OUT_PAD = 128           # lane-dense output slab width


def mlp_kernel(x_ref, w1_ref, w3_ref, mask_ref, o_ref):
    # cast f32 activations -> bf16 in-kernel (avoids a separate wrapper pass)
    x = x_ref[...].astype(jnp.bfloat16)

    # fc1 + relu (bf16 operands, f32 accumulation on the MXU)
    h = jnp.dot(x, w1_ref[...], preferred_element_type=jnp.float32)
    h = jnp.maximum(h, 0.0).astype(jnp.bfloat16)

    # fc3 onto a lane-dense (tb, 128) slab; columns >= N_CLASSES are zero padding
    logits = jnp.dot(h, w3_ref[...], preferred_element_type=jnp.float32)

    # additive mask: 0 for real classes, -1e30 for padded columns (exp -> 0)
    logits = logits + mask_ref[...]

    # numerically stable softmax with exact normalization
    m = jnp.max(logits, axis=-1, keepdims=True)
    e = jnp.exp(logits - m)
    denom = jnp.sum(e, axis=-1, keepdims=True)
    o_ref[...] = (e / denom).astype(o_ref.dtype)


def _round_up(n, m):
    return ((n + m - 1) // m) * m


def prepare_params(w1, w3):
    """One-time parameter preprocessing (hoisted out of the per-call path).
    w1: (256, 784), w3: (10, 256) in PyTorch (out, in) layout."""
    w1_p = w1.T.astype(jnp.bfloat16)                                   # (784, 256)
    w3_p = jnp.zeros((HIDDEN, OUT_PAD), jnp.bfloat16).at[:, :N_CLASSES].set(
        w3.T.astype(jnp.bfloat16))                                     # (256, 128)
    mask = jnp.where(jnp.arange(OUT_PAD) < N_CLASSES, 0.0, -1e30)
    mask = mask.astype(jnp.float32)[None, :]                           # (1, 128)
    return w1_p, w3_p, mask


def mlp_forward(x, w1_p, w3_p, mask, *, tb_max=512):
    """x: (..., 28, 28) or (B, 784) f32; returns (B, 10) softmax probabilities (f32)."""
    x = x.reshape(-1, IN_FEATURES)          # matches x.view(-1, 784)
    B = x.shape[0]

    # adaptive batch tile: small batches don't pad up to a huge tile,
    # large batches get >= 2 grid steps (both v7x TensorCores busy).
    tb = min(tb_max, _round_up(B, 16))
    if B >= 32:
        tb = min(tb, _round_up(pl.cdiv(B, 2), 16))
    Bp = pl.cdiv(B, tb) * tb
    if Bp != B:
        x = jnp.zeros((Bp, IN_FEATURES), x.dtype).at[:B].set(x)

    flops = 2 * Bp * (IN_FEATURES * HIDDEN + HIDDEN * OUT_PAD)
    bytes_accessed = (Bp * IN_FEATURES * 4          # f32 x read
                      + IN_FEATURES * HIDDEN * 2    # bf16 w1
                      + HIDDEN * OUT_PAD * 2        # bf16 w3
                      + OUT_PAD * 4                 # mask
                      + Bp * OUT_PAD * 4)           # f32 output slab

    out_padded = pl.pallas_call(
        mlp_kernel,
        out_shape=jax.ShapeDtypeStruct((Bp, OUT_PAD), jnp.float32),
        grid_spec=pltpu.PrefetchScalarGridSpec(
            num_scalar_prefetch=0,
            grid=(Bp // tb,),
            in_specs=[
                pl.BlockSpec((tb, IN_FEATURES), lambda i: (i, 0)),      # batch-tiled x (K=784, no pad)
                pl.BlockSpec((IN_FEATURES, HIDDEN), lambda i: (0, 0)),  # w1: VMEM-resident
                pl.BlockSpec((HIDDEN, OUT_PAD), lambda i: (0, 0)),      # w3: VMEM-resident
                pl.BlockSpec((1, OUT_PAD), lambda i: (0, 0)),           # class mask
            ],
            out_specs=pl.BlockSpec((tb, OUT_PAD), lambda i: (i, 0)),
        ),
        compiler_params=pltpu.CompilerParams(
            dimension_semantics=("parallel",)),  # shard batch tiles across TCs on v7x
        cost_estimate=pl.CostEstimate(
            flops=flops,
            transcendentals=Bp * OUT_PAD,
            bytes_accessed=bytes_accessed),
    )(x, w1_p, w3_p, mask)

    return out_padded[:B, :N_CLASSES]


def xavier_uniform(key, fan_out, fan_in, dtype=jnp.float32):
    # matches torch.nn.init.xavier_uniform_ on a (fan_out, fan_in) Linear weight
    bound = (6.0 / (fan_in + fan_out)) ** 0.5
    return jax.random.uniform(key, (fan_out, fan_in), dtype, minval=-bound, maxval=bound)


if __name__ == "__main__":
    key = jax.random.PRNGKey(0)
    k_x, k_w1, k_w3 = jax.random.split(key, 3)

    # deterministic params in PyTorch layout (out, in)
    w1 = xavier_uniform(k_w1, HIDDEN, IN_FEATURES)   # fc1.weight: (256, 784)
    w3 = xavier_uniform(k_w3, N_CLASSES, HIDDEN)     # fc3.weight: (10, 256)

    # one-time weight re-layout / cast (outside the per-call path)
    w1_p, w3_p, mask = prepare_params(w1, w3)

    # small MNIST-like input batch; forward does x.view(-1, 784)
    B = 8
    x = jax.random.normal(k_x, (B, 1, 28, 28), dtype=jnp.float32)

    out = mlp_forward(x, w1_p, w3_p, mask)
    jax.block_until_ready(out)

    # sanity: shape, exact softmax normalization, non-negativity
    assert out.shape == (B, N_CLASSES)
    assert jnp.allclose(jnp.sum(out, axis=-1), 1.0, atol=1e-3)
    assert bool(jnp.all(out >= 0.0))

    # compare against a pure-JAX f32 reference (bf16 matmul tolerance)
    x_flat = x.reshape(-1, IN_FEATURES)
    ref = jax.nn.softmax(jnp.maximum(x_flat @ w1.T, 0.0) @ w3.T, axis=-1)
    assert jnp.allclose(out, ref, atol=2e-2)

    print("KERNEL_OK")
</pallas_src>

<mosaic_0001>
module attributes {stable_mosaic.version = 11 : i64} {
  func.func @mlp_kernel(%arg0: i32, %arg1: memref<16x784xf32, #tpu.memory_space<vmem>>, %arg2: memref<784x256xbf16, #tpu.memory_space<vmem>>, %arg3: memref<256x128xbf16, #tpu.memory_space<vmem>>, %arg4: memref<1x128xf32, #tpu.memory_space<vmem>>, %arg5: memref<16x128xf32, #tpu.memory_space<vmem>>) attributes {dimension_semantics = [#tpu.dimension_semantics<parallel>], iteration_bounds = array<i64: 1>, scalar_prefetch = 0 : i64, scratch_operands = 0 : i64, tpu.core_type = #tpu.core_type<tc>, window_params = [{transform_indices = @transform_0, window_bounds = array<i64: 16, 784>}, {pipeline_mode = #tpu.pipeline_mode<synchronous>, transform_indices = @transform_1, window_bounds = array<i64: 784, 256>}, {pipeline_mode = #tpu.pipeline_mode<synchronous>, transform_indices = @transform_2, window_bounds = array<i64: 256, 128>}, {pipeline_mode = #tpu.pipeline_mode<synchronous>, transform_indices = @transform_3, window_bounds = array<i64: 1, 128>}, {transform_indices = @transform_4, window_bounds = array<i64: 16, 128>}]} {
    %c0 = arith.constant 0 : index
    %c0_0 = arith.constant 0 : index
    %0 = vector.load %arg1[%c0, %c0_0] : memref<16x784xf32, #tpu.memory_space<vmem>>, vector<16x784xf32>
    %1 = arith.truncf %0 : vector<16x784xf32> to vector<16x784xbf16>
    %c0_1 = arith.constant 0 : index
    %c0_2 = arith.constant 0 : index
    %2 = vector.load %arg2[%c0_1, %c0_2] : memref<784x256xbf16, #tpu.memory_space<vmem>>, vector<784x256xbf16>
    %cst = arith.constant dense<0.000000e+00> : vector<16x256xf32>
    %3 = tpu.matmul %1, %2, %cst {dimension_numbers = #tpu.dot_dimension_numbers<[1], [0], [0], [1], [0, 0, 1, 1], [], []>} : vector<16x784xbf16>, vector<784x256xbf16>, vector<16x256xf32> -> vector<16x256xf32>
    %cst_3 = arith.constant 0.000000e+00 : f32
    %4 = vector.broadcast %cst_3 : f32 to vector<16x256xf32>
    %5 = arith.maximumf %3, %4 : vector<16x256xf32>
    %6 = arith.truncf %5 : vector<16x256xf32> to vector<16x256xbf16>
    %c0_4 = arith.constant 0 : index
    %c0_5 = arith.constant 0 : index
    %7 = vector.load %arg3[%c0_4, %c0_5] : memref<256x128xbf16, #tpu.memory_space<vmem>>, vector<256x128xbf16>
    %cst_6 = arith.constant dense<0.000000e+00> : vector<16x128xf32>
    %8 = tpu.matmul %6, %7, %cst_6 {dimension_numbers = #tpu.dot_dimension_numbers<[1], [0], [0], [1], [0, 0, 1, 1], [], []>} : vector<16x256xbf16>, vector<256x128xbf16>, vector<16x128xf32> -> vector<16x128xf32>
    %c0_7 = arith.constant 0 : index
    %c0_8 = arith.constant 0 : index
    %9 = vector.load %arg4[%c0_7, %c0_8] : memref<1x128xf32, #tpu.memory_space<vmem>>, vector<1x128xf32>
    %10 = vector.broadcast %9 : vector<1x128xf32> to vector<16x128xf32>
    %11 = arith.addf %8, %10 : vector<16x128xf32>
    %cst_9 = arith.constant dense<0xFF800000> : vector<16xf32>
    %12 = vector.multi_reduction <maximumf>, %11, %cst_9 [1] : vector<16x128xf32> to vector<16xf32>
    %13 = vector.shape_cast %12 : vector<16xf32> to vector<16x1xf32>
    %14 = vector.broadcast %13 : vector<16x1xf32> to vector<16x128xf32>
    %15 = arith.subf %11, %14 : vector<16x128xf32>
    %16 = math.exp %15 : vector<16x128xf32>
    %cst_10 = arith.constant dense<0.000000e+00> : vector<16xf32>
    %17 = vector.multi_reduction <add>, %16, %cst_10 [1] : vector<16x128xf32> to vector<16xf32>
    %18 = vector.shape_cast %17 : vector<16xf32> to vector<16x1xf32>
    %19 = vector.broadcast %18 : vector<16x1xf32> to vector<16x128xf32>
    %20 = arith.divf %16, %19 : vector<16x128xf32>
    %c0_11 = arith.constant 0 : index
    %c0_12 = arith.constant 0 : index
    %21 = vector.load %arg5[%c0_11, %c0_12] : memref<16x128xf32, #tpu.memory_space<vmem>>, vector<16x128xf32>
    tpu.vector_store %arg5[%c0_11, %c0_12], %20 {strides = array<i32>} : memref<16x128xf32, #tpu.memory_space<vmem>>, vector<16x128xf32>,
    return
  }
  func.func @transform_0(%arg0: i32) -> (i32, i32) {
    %c0_i32 = arith.constant 0 : i32
    %c0_i32_0 = arith.constant 0 : i32
    return %arg0, %c0_i32 : i32, i32
  }
  func.func @transform_1(%arg0: i32) -> (i32, i32) {
    %c0_i32 = arith.constant 0 : i32
    %c0_i32_0 = arith.constant 0 : i32
    %c0_i32_1 = arith.constant 0 : i32
    return %c0_i32, %c0_i32_0 : i32, i32
  }
  func.func @transform_2(%arg0: i32) -> (i32, i32) {
    %c0_i32 = arith.constant 0 : i32
    %c0_i32_0 = arith.constant 0 : i32
    %c0_i32_1 = arith.constant 0 : i32
    return %c0_i32, %c0_i32_0 : i32, i32
  }
  func.func @transform_3(%arg0: i32) -> (i32, i32) {
    %c0_i32 = arith.constant 0 : i32
    %c0_i32_0 = arith.constant 0 : i32
    %c0_i32_1 = arith.constant 0 : i32
    return %c0_i32, %c0_i32_0 : i32, i32
  }
  func.func @transform_4(%arg0: i32) -> (i32, i32) {
    %c0_i32 = arith.constant 0 : i32
    %c0_i32_0 = arith.constant 0 : i32
    return %arg0, %c0_i32 : i32, i32
  }
}

</mosaic_0001>

<llo_original>
// kernel: tpu_custom_call.1
$region0: #{tpu_custom_call.1}
  #allocation0 [shape = 'u32[]', space=smem, size = 0x4, offset = 0x4, fixed_abs, tag = 'smem constant byte address 0x4 - core index']
  #allocation1 [shape = 'u32[144,128]{1,0:T(1,128)}', space=vmem, size = 0x12000, scoped, tag = 'internal scratch']
  %s0 = inlined_call_operand.hbm [shape: f32[16,784], index: 0, kind: input, shape index: {}]
  %s1 = inlined_call_operand.hbm [shape: bf16[784,256], index: 1, kind: input, shape index: {}]
  %s2 = inlined_call_operand.hbm [shape: bf16[256,128], index: 2, kind: input, shape index: {}]
  %s3 = inlined_call_operand.vmem [shape: f32[1,128], index: 3, kind: input, shape index: {}]
  %s4 = inlined_call_operand.hbm [shape: f32[16,128], index: 4, kind: output, shape index: {}]
  %s5 = sld [smem:[#allocation0]]
  $region38: #{tpu_custom_call.1} parent=0
    _
  %s7 = ssub.s32 1, %s5
  %s8 = scalar_select 0, %s7, %s5
  $region1: #{tpu_custom_call.1} parent=0
    #allocation2 [shape = 'u8[57344]{0}', space=vmem, size = 0xe000, scoped, tag = 'input window, operand 0, single buffered']
    #allocation3 [shape = 's32[1]{0}', space=sflag, size = 0x4, scoped, tag = 'scoped memory for tpu_custom_call.1']
    #allocation4 [shape = 's32[1]{0}', space=sflag, size = 0x4, scoped, tag = 'scoped memory for tpu_custom_call.1']
    #allocation5 [shape = 'u8[401408]{0}', space=vmem, size = 0x62000, scoped, tag = 'input window, operand 1, single buffered']
    #allocation6 [shape = 's32[1]{0}', space=sflag, size = 0x4, scoped, tag = 'scoped memory for tpu_custom_call.1']
    #allocation7 [shape = 'u8[65536]{0}', space=vmem, size = 0x10000, scoped, tag = 'input window, operand 2, single buffered']
    #allocation8 [shape = 'u8[8192]{0}', space=vmem, size = 0x2000, scoped, tag = 'output window, operand 0, single buffered']
    %9 = vsyncpa [#allocation3], 0
    %10 = vsyncpa [#allocation6], 0
    %11 = vsyncpa [#allocation4], 0
    // Predicated region
    $region2: #{tpu_custom_call.1} parent=1 // pred_check
      _
    $region3: #{tpu_custom_call.1} parent=1 // pred_check_branch
      %13 = sbr.rel (0) target = $region5
    $region4: #{tpu_custom_call.1} parent=1 // pred_region
      %s15 = ssub.s32 1792, 1792
      %16 = vsyncadd [#allocation3], %s15
      %s17 = sshll.u32 [#allocation2], 4
      %s18 = int_to_ptr.vmem [resolvable:$true] %s17
      %23 = dma.hbm_to_vmem [thread:$0]  %s0, 1792, %s18, [#allocation3], 896, 896, 56
    $region5: #{tpu_custom_call.1} parent=1 // pred_fallthru
      _
    // Predicated region
    $region6: #{tpu_custom_call.1} parent=1 // pred_check
      _
    $region7: #{tpu_custom_call.1} parent=1 // pred_check_branch
      %25 = sbr.rel (0) target = $region9
    $region8: #{tpu_custom_call.1} parent=1 // pred_region
      %s27 = ssub.s32 12544, 12544
      %28 = vsyncadd [#allocation6], %s27
      %s29 = sshll.u32 [#allocation5], 4
      %s30 = int_to_ptr.vmem [resolvable:$true] %s29
      %35 = dma.hbm_to_vmem [thread:$0]  %s1, 12544, %s30, [#allocation6], 128, 128, 8
    $region9: #{tpu_custom_call.1} parent=1 // pred_fallthru
      _
    // Predicated region
    $region10: #{tpu_custom_call.1} parent=1 // pred_check
      _
    $region11: #{tpu_custom_call.1} parent=1 // pred_check_branch
      %37 = sbr.rel (0) target = $region13
    $region12: #{tpu_custom_call.1} parent=1 // pred_region
      %s39 = ssub.s32 2048, 2048
      %40 = vsyncadd [#allocation6], %s39
      %s41 = sshll.u32 [#allocation7], 4
      %s42 = int_to_ptr.vmem [resolvable:$true] %s41
      %47 = dma.hbm_to_vmem [thread:$0]  %s2, 2048, %s42, [#allocation6], 64, 64, 4
    $region13: #{tpu_custom_call.1} parent=1 // pred_fallthru
      _
    // Predicated region
    $region14: #{tpu_custom_call.1} parent=1 // pred_check
      _
    $region15: #{tpu_custom_call.1} parent=1 // pred_check_branch
      %49 = sbr.rel (0) target = $region17
    $region16: #{tpu_custom_call.1} parent=1 // pred_region
      _
    $region17: #{tpu_custom_call.1} parent=1 // pred_fallthru
      _
    // Predicated region
    $region18: #{tpu_custom_call.1} parent=1 // pred_check
      _
    $region19: #{tpu_custom_call.1} parent=1 // pred_check_branch
      %51 = sbr.rel (0) target = $region21
    $region20: #{tpu_custom_call.1} parent=1 // pred_region
      %52 = dma.done [#allocation3], 1792
    $region21: #{tpu_custom_call.1} parent=1 // pred_fallthru
      _
    // Predicated region
    $region22: #{tpu_custom_call.1} parent=1 // pred_check
      _
    $region23: #{tpu_custom_call.1} parent=1 // pred_check_branch
      %54 = sbr.rel (0) target = $region25
    $region24: #{tpu_custom_call.1} parent=1 // pred_region
      %55 = dma.done [#allocation6], 12544
    $region25: #{tpu_custom_call.1} parent=1 // pred_fallthru
      _
    // Predicated region
    $region26: #{tpu_custom_call.1} parent=1 // pred_check
      _
    $region27: #{tpu_custom_call.1} parent=1 // pred_check_branch
      %57 = sbr.rel (0) target = $region29
    $region28: #{tpu_custom_call.1} parent=1 // pred_region
      %58 = dma.done [#allocation6], 2048
    $region29: #{tpu_custom_call.1} parent=1 // pred_fallthru
      _
    %v60 = vld [vmem:[#allocation2] sm:$0xff]
    %v61 = vld [vmem:[#allocation2 + $0x8] sm:$0xff]
    %v62 = vld [vmem:[#allocation2 + $0x10] sm:$0xff]
    %v63 = vld [vmem:[#allocation2 + $0x18] sm:$0xff]
    %v64 = vld [vmem:[#allocation2 + $0x20] sm:$0xff]
    %v65 = vld [vmem:[#allocation2 + $0x28] sm:$0xff]
    %v66 = vld [vmem:[#allocation2 + $0x30] sm:$0xff]
    %v67 = vld [vmem:[#allocation2 + $0x38] sm:$0xff]
    %v68 = vld [vmem:[#allocation2 + $0x40] sm:$0xff]
    %v69 = vld [vmem:[#allocation2 + $0x48] sm:$0xff]
    %v70 = vld [vmem:[#allocation2 + $0x50] sm:$0xff]
    %v71 = vld [vmem:[#allocation2 + $0x58] sm:$0xff]
    %v72 = vld [vmem:[#allocation2 + $0x60] sm:$0xff]
    %v73 = vld [vmem:[#allocation2 + $0x68] sm:$0xff]
    %v74 = vpack.c.bf16 %v67, %v60
    %v75 = vpack.c.bf16 %v68, %v61
    %v76 = vpack.c.bf16 %v69, %v62
    %v77 = vpack.c.bf16 %v70, %v63
    %v78 = vpack.c.bf16 %v71, %v64
    %v79 = vpack.c.bf16 %v72, %v65
    %v80 = vpack.c.bf16 %v73, %v66
    %v81 = vld [vmem:[#allocation5] sm:$0xff]
    %v82 = vld [vmem:[#allocation5 + $0x8] sm:$0xff]
    %v83 = vld [vmem:[#allocation5 + $0x10] sm:$0xff]
    %v84 = vld [vmem:[#allocation5 + $0x18] sm:$0xff]
    %v85 = vld [vmem:[#allocation5 + $0x20] sm:$0xff]
    %v86 = vld [vmem:[#allocation5 + $0x28] sm:$0xff]
    %v87 = vld [vmem:[#allocation5 + $0x30] sm:$0xff]
    %v88 = vld [vmem:[#allocation5 + $0x38] sm:$0xff]
    %v89 = vld [vmem:[#allocation5 + $0x40] sm:$0xff]
    %v90 = vld [vmem:[#allocation5 + $0x48] sm:$0xff]
    %v91 = vld [vmem:[#allocation5 + $0x50] sm:$0xff]
    %v92 = vld [vmem:[#allocation5 + $0x58] sm:$0xff]
    %v93 = vld [vmem:[#allocation5 + $0x60] sm:$0xff]
    %v94 = vld [vmem:[#allocation5 + $0x68] sm:$0xff]
    %v95 = vld [vmem:[#allocation5 + $0x70] sm:$0xff]
    %v96 = vld [vmem:[#allocation5 + $0x78] sm:$0xff]
    %v97 = vld [vmem:[#allocation5 + $0x80] sm:$0xff]
    %v98 = vld [vmem:[#allocation5 + $0x88] sm:$0xff]
    %v99 = vld [vmem:[#allocation5 + $0x90] sm:$0xff]
    %v100 = vld [vmem:[#allocation5 + $0x98] sm:$0xff]
    %v101 = vld [vmem:[#allocation5 + $0xa0] sm:$0xff]
    %v102 = vld [vmem:[#allocation5 + $0xa8] sm:$0xff]
    %v103 = vld [vmem:[#allocation5 + $0xb0] sm:$0xff]
    %v104 = vld [vmem:[#allocation5 + $0xb8] sm:$0xff]
    %v105 = vld [vmem:[#allocation5 + $0xc0] sm:$0xff]
    %v106 = vld [vmem:[#allocation5 + $0xc8] sm:$0xff]
    %v107 = vld [vmem:[#allocation5 + $0xd0] sm:$0xff]
    %v108 = vld [vmem:[#allocation5 + $0xd8] sm:$0xff]
    %v109 = vld [vmem:[#allocation5 + $0xe0] sm:$0xff]
    %v110 = vld [vmem:[#allocation5 + $0xe8] sm:$0xff]
    %v111 = vld [vmem:[#allocation5 + $0xf0] sm:$0xff]
    %v112 = vld [vmem:[#allocation5 + $0xf8] sm:$0xff]
    %v113 = vld [vmem:[#allocation5 + $0x100] sm:$0xff]
    %v114 = vld [vmem:[#allocation5 + $0x108] sm:$0xff]
    %v115 = vld [vmem:[#allocation5 + $0x110] sm:$0xff]
    %v116 = vld [vmem:[#allocation5 + $0x118] sm:$0xff]
    %v117 = vld [vmem:[#allocation5 + $0x120] sm:$0xff]
    %v118 = vld [vmem:[#allocation5 + $0x128] sm:$0xff]
    %v119 = vld [vmem:[#allocation5 + $0x130] sm:$0xff]
    %v120 = vld [vmem:[#allocation5 + $0x138] sm:$0xff]
    %v121 = vld [vmem:[#allocation5 + $0x140] sm:$0xff]
    %v122 = vld [vmem:[#allocation5 + $0x148] sm:$0xff]
    %v123 = vld [vmem:[#allocation5 + $0x150] sm:$0xff]
    %v124 = vld [vmem:[#allocation5 + $0x158] sm:$0xff]
    %v125 = vld [vmem:[#allocation5 + $0x160] sm:$0xff]
    %v126 = vld [vmem:[#allocation5 + $0x168] sm:$0xff]
    %v127 = vld [vmem:[#allocation5 + $0x170] sm:$0xff]
    %v128 = vld [vmem:[#allocation5 + $0x178] sm:$0xff]
    %v129 = vld [vmem:[#allocation5 + $0x180] sm:$0xff]
    %v130 = vld [vmem:[#allocation5 + $0x188] sm:$0xff]
    %v131 = vld [vmem:[#allocation5 + $0x190] sm:$0xff]
    %v132 = vld [vmem:[#allocation5 + $0x198] sm:$0xff]
    %v133 = vld [vmem:[#allocation5 + $0x1a0] sm:$0xff]
    %v134 = vld [vmem:[#allocation5 + $0x1a8] sm:$0xff]
    %v135 = vld [vmem:[#allocation5 + $0x1b0] sm:$0xff]
    %v136 = vld [vmem:[#allocation5 + $0x1b8] sm:$0xff]
    %v137 = vld [vmem:[#allocation5 + $0x1c0] sm:$0xff]
    %v138 = vld [vmem:[#allocation5 + $0x1c8] sm:$0xff]
    %v139 = vld [vmem:[#allocation5 + $0x1d0] sm:$0xff]
    %v140 = vld [vmem:[#allocation5 + $0x1d8] sm:$0xff]
    %v141 = vld [vmem:[#allocation5 + $0x1e0] sm:$0xff]
    %v142 = vld [vmem:[#allocation5 + $0x1e8] sm:$0xff]
    %v143 = vld [vmem:[#allocation5 + $0x1f0] sm:$0xff]
    %v144 = vld [vmem:[#allocation5 + $0x1f8] sm:$0xff]
    %v145 = vld [vmem:[#allocation5 + $0x200] sm:$0xff]
    %v146 = vld [vmem:[#allocation5 + $0x208] sm:$0xff]
    %v147 = vld [vmem:[#allocation5 + $0x210] sm:$0xff]
    %v148 = vld [vmem:[#allocation5 + $0x218] sm:$0xff]
    %v149 = vld [vmem:[#allocation5 + $0x220] sm:$0xff]
    %v150 = vld [vmem:[#allocation5 + $0x228] sm:$0xff]
    %v151 = vld [vmem:[#allocation5 + $0x230] sm:$0xff]
    %v152 = vld [vmem:[#allocation5 + $0x238] sm:$0xff]
    %v153 = vld [vmem:[#allocation5 + $0x240] sm:$0xff]
    %v154 = vld [vmem:[#allocation5 + $0x248] sm:$0xff]
    %v155 = vld [vmem:[#allocation5 + $0x250] sm:$0xff]
    %v156 = vld [vmem:[#allocation5 + $0x258] sm:$0xff]
    %v157 = vld [vmem:[#allocation5 + $0x260] sm:$0xff]
    %v158 = vld [vmem:[#allocation5 + $0x268] sm:$0xff]
    %v159 = vld [vmem:[#allocation5 + $0x270] sm:$0xff]
    %v160 = vld [vmem:[#allocation5 + $0x278] sm:$0xff]
    %v161 = vld [vmem:[#allocation5 + $0x280] sm:$0xff]
    %v162 = vld [vmem:[#allocation5 + $0x288] sm:$0xff]
    %v163 = vld [vmem:[#allocation5 + $0x290] sm:$0xff]
    %v164 = vld [vmem:[#allocation5 + $0x298] sm:$0xff]
    %v165 = vld [vmem:[#allocation5 + $0x2a0] sm:$0xff]
    %v166 = vld [vmem:[#allocation5 + $0x2a8] sm:$0xff]
    %v167 = vld [vmem:[#allocation5 + $0x2b0] sm:$0xff]
    %v168 = vld [vmem:[#allocation5 + $0x2b8] sm:$0xff]
    %v169 = vld [vmem:[#allocation5 + $0x2c0] sm:$0xff]
    %v170 = vld [vmem:[#allocation5 + $0x2c8] sm:$0xff]
    %v171 = vld [vmem:[#allocation5 + $0x2d0] sm:$0xff]
    %v172 = vld [vmem:[#allocation5 + $0x2d8] sm:$0xff]
    %v173 = vld [vmem:[#allocation5 + $0x2e0] sm:$0xff]
    %v174 = vld [vmem:[#allocation5 + $0x2e8] sm:$0xff]
    %v175 = vld [vmem:[#allocation5 + $0x2f0] sm:$0xff]
    %v176 = vld [vmem:[#allocation5 + $0x2f8] sm:$0xff]
    %v177 = vld [vmem:[#allocation5 + $0x300] sm:$0xff]
    %v178 = vld [vmem:[#allocation5 + $0x308] sm:$0xff]
    %v277 = vunpack.c.l.b16 %v81
    %v278 = vunpack.c.h.b16 %v81
    %v279 = vunpack.c.l.b16 %v82
    %v280 = vunpack.c.h.b16 %v82
    %v281 = vunpack.c.l.b16 %v83
    %v282 = vunpack.c.h.b16 %v83
    %v283 = vunpack.c.l.b16 %v84
    %v284 = vunpack.c.h.b16 %v84
    %v285 = vunpack.c.l.b16 %v85
    %v286 = vunpack.c.h.b16 %v85
    %v287 = vunpack.c.l.b16 %v86
    %v288 = vunpack.c.h.b16 %v86
    %v289 = vunpack.c.l.b16 %v87
    %v290 = vunpack.c.h.b16 %v87
    %v291 = vunpack.c.l.b16 %v88
    %v292 = vunpack.c.h.b16 %v88
    %v293 = vunpack.c.l.b16 %v89
    %v294 = vunpack.c.h.b16 %v89
    %v295 = vunpack.c.l.b16 %v90
    %v296 = vunpack.c.h.b16 %v90
    %v297 = vunpack.c.l.b16 %v91
    %v298 = vunpack.c.h.b16 %v91
    %v299 = vunpack.c.l.b16 %v92
    %v300 = vunpack.c.h.b16 %v92
    %v301 = vunpack.c.l.b16 %v93
    %v302 = vunpack.c.h.b16 %v93
    %v303 = vunpack.c.l.b16 %v94
    %v304 = vunpack.c.h.b16 %v94
    %v305 = vunpack.c.l.b16 %v95
    %v306 = vunpack.c.h.b16 %v95
    %v307 = vunpack.c.l.b16 %v96
    %v308 = vunpack.c.h.b16 %v96
    %v309 = vunpack.c.l.b16 %v97
    %v310 = vunpack.c.h.b16 %v97
    %v311 = vunpack.c.l.b16 %v98
    %v312 = vunpack.c.h.b16 %v98
    %v313 = vunpack.c.l.b16 %v99
    %v314 = vunpack.c.h.b16 %v99
    %v315 = vunpack.c.l.b16 %v100
    %v316 = vunpack.c.h.b16 %v100
    %v317 = vunpack.c.l.b16 %v101
    %v318 = vunpack.c.h.b16 %v101
    %v319 = vunpack.c.l.b16 %v102
    %v320 = vunpack.c.h.b16 %v102
    %v321 = vunpack.c.l.b16 %v103
    %v322 = vunpack.c.h.b16 %v103
    %v323 = vunpack.c.l.b16 %v104
    %v324 = vunpack.c.h.b16 %v104
    %v325 = vunpack.c.l.b16 %v105
    %v326 = vunpack.c.h.b16 %v105
    %v327 = vunpack.c.l.b16 %v106
    %v328 = vunpack.c.h.b16 %v106
    %v329 = vunpack.c.l.b16 %v107
    %v330 = vunpack.c.h.b16 %v107
    %v331 = vunpack.c.l.b16 %v108
    %v332 = vunpack.c.h.b16 %v108
    %v333 = vunpack.c.l.b16 %v109
    %v334 = vunpack.c.h.b16 %v109
    %v335 = vunpack.c.l.b16 %v110
    %v336 = vunpack.c.h.b16 %v110
    %v337 = vunpack.c.l.b16 %v111
    %v338 = vunpack.c.h.b16 %v111
    %v339 = vunpack.c.l.b16 %v112
    %v340 = vunpack.c.h.b16 %v112
    %v341 = vunpack.c.l.b16 %v113
    %v342 = vunpack.c.h.b16 %v113
    %v343 = vunpack.c.l.b16 %v114
    %v344 = vunpack.c.h.b16 %v114
    %v345 = vunpack.c.l.b16 %v115
    %v346 = vunpack.c.h.b16 %v115
    %v347 = vunpack.c.l.b16 %v116
    %v348 = vunpack.c.h.b16 %v116
    %v349 = vunpack.c.l.b16 %v117
    %v350 = vunpack.c.h.b16 %v117
    %v351 = vunpack.c.l.b16 %v118
    %v352 = vunpack.c.h.b16 %v118
    %v353 = vunpack.c.l.b16 %v119
    %v354 = vunpack.c.h.b16 %v119
    %v355 = vunpack.c.l.b16 %v120
    %v356 = vunpack.c.h.b16 %v120
    %v357 = vunpack.c.l.b16 %v121
    %v358 = vunpack.c.h.b16 %v121
    %v359 = vunpack.c.l.b16 %v122
    %v360 = vunpack.c.h.b16 %v122
    %v361 = vunpack.c.l.b16 %v123
    %v362 = vunpack.c.h.b16 %v123
    %v363 = vunpack.c.l.b16 %v124
    %v364 = vunpack.c.h.b16 %v124
    %v365 = vunpack.c.l.b16 %v125
    %v366 = vunpack.c.h.b16 %v125
    %v367 = vunpack.c.l.b16 %v126
    %v368 = vunpack.c.h.b16 %v126
    %v369 = vunpack.c.l.b16 %v127
    %v370 = vunpack.c.h.b16 %v127
    %v371 = vunpack.c.l.b16 %v128
    %v372 = vunpack.c.h.b16 %v128
    %v373 = vunpack.c.l.b16 %v129
    %v374 = vunpack.c.h.b16 %v129
    %v375 = vunpack.c.l.b16 %v130
    %v376 = vunpack.c.h.b16 %v130
    %v377 = vunpack.c.l.b16 %v131
    %v378 = vunpack.c.h.b16 %v131
    %v379 = vunpack.c.l.b16 %v132
    %v380 = vunpack.c.h.b16 %v132
    %v381 = vunpack.c.l.b16 %v133
    %v382 = vunpack.c.h.b16 %v133
    %v383 = vunpack.c.l.b16 %v134
    %v384 = vunpack.c.h.b16 %v134
    %v385 = vunpack.c.l.b16 %v135
    %v386 = vunpack.c.h.b16 %v135
    %v387 = vunpack.c.l.b16 %v136
    %v388 = vunpack.c.h.b16 %v136
    %v389 = vunpack.c.l.b16 %v137
    %v390 = vunpack.c.h.b16 %v137
    %v391 = vunpack.c.l.b16 %v138
    %v392 = vunpack.c.h.b16 %v138
    %v393 = vunpack.c.l.b16 %v139
    %v394 = vunpack.c.h.b16 %v139
    %v395 = vunpack.c.l.b16 %v140
    %v396 = vunpack.c.h.b16 %v140
    %v397 = vunpack.c.l.b16 %v141
    %v398 = vunpack.c.h.b16 %v141
    %v399 = vunpack.c.l.b16 %v142
    %v400 = vunpack.c.h.b16 %v142
    %v401 = vunpack.c.l.b16 %v143
    %v402 = vunpack.c.h.b16 %v143
    %v403 = vunpack.c.l.b16 %v144
    %v404 = vunpack.c.h.b16 %v144
    %v405 = vunpack.c.l.b16 %v145
    %v406 = vunpack.c.h.b16 %v145
    %v407 = vunpack.c.l.b16 %v146
    %v408 = vunpack.c.h.b16 %v146
    %v409 = vunpack.c.l.b16 %v147
    %v410 = vunpack.c.h.b16 %v147
    %v411 = vunpack.c.l.b16 %v148
    %v412 = vunpack.c.h.b16 %v148
    %v413 = vunpack.c.l.b16 %v149
    %v414 = vunpack.c.h.b16 %v149
    %v415 = vunpack.c.l.b16 %v150
    %v416 = vunpack.c.h.b16 %v150
    %v417 = vunpack.c.l.b16 %v151
    %v418 = vunpack.c.h.b16 %v151
    %v419 = vunpack.c.l.b16 %v152
    %v420 = vunpack.c.h.b16 %v152
    %v421 = vunpack.c.l.b16 %v153
    %v422 = vunpack.c.h.b16 %v153
    %v423 = vunpack.c.l.b16 %v154
    %v424 = vunpack.c.h.b16 %v154
    %v425 = vunpack.c.l.b16 %v155
    %v426 = vunpack.c.h.b16 %v155
    %v427 = vunpack.c.l.b16 %v156
    %v428 = vunpack.c.h.b16 %v156
    %v429 = vunpack.c.l.b16 %v157
    %v430 = vunpack.c.h.b16 %v157
    %v431 = vunpack.c.l.b16 %v158
    %v432 = vunpack.c.h.b16 %v158
    %v433 = vunpack.c.l.b16 %v159
    %v434 = vunpack.c.h.b16 %v159
    %v435 = vunpack.c.l.b16 %v160
    %v436 = vunpack.c.h.b16 %v160
    %v437 = vunpack.c.l.b16 %v161
    %v438 = vunpack.c.h.b16 %v161
    %v439 = vunpack.c.l.b16 %v162
    %v440 = vunpack.c.h.b16 %v162
    %v441 = vunpack.c.l.b16 %v163
    %v442 = vunpack.c.h.b16 %v163
    %v443 = vunpack.c.l.b16 %v164
    %v444 = vunpack.c.h.b16 %v164
    %v445 = vunpack.c.l.b16 %v165
    %v446 = vunpack.c.h.b16 %v165
    %v447 = vunpack.c.l.b16 %v166
    %v448 = vunpack.c.h.b16 %v166
    %v449 = vunpack.c.l.b16 %v167
    %v450 = vunpack.c.h.b16 %v167
    %v451 = vunpack.c.l.b16 %v168
    %v452 = vunpack.c.h.b16 %v168
    %v453 = vunpack.c.l.b16 %v169
    %v454 = vunpack.c.h.b16 %v169
    %v455 = vunpack.c.l.b16 %v170
    %v456 = vunpack.c.h.b16 %v170
    %v457 = vunpack.c.l.b16 %v171
    %v458 = vunpack.c.h.b16 %v171
    %v459 = vunpack.c.l.b16 %v172
    %v460 = vunpack.c.h.b16 %v172
    %v461 = vunpack.c.l.b16 %v173
    %v462 = vunpack.c.h.b16 %v173
    %v463 = vunpack.c.l.b16 %v174
    %v464 = vunpack.c.h.b16 %v174
    %v465 = vunpack.c.l.b16 %v175
    %v466 = vunpack.c.h.b16 %v175
    %v467 = vunpack.c.l.b16 %v176
    %v468 = vunpack.c.h.b16 %v176
    %v469 = vunpack.c.l.b16 %v177
    %v470 = vunpack.c.h.b16 %v177
    %v471 = vunpack.c.l.b16 %v178
    %v472 = vunpack.c.h.b16 %v178
    %v473 = vpack.c.b16 %v279, %v277
    %v474 = vpack.c.b16 %v280, %v278
    %v475 = vpack.c.b16 %v283, %v281
    %v476 = vpack.c.b16 %v284, %v282
    %v477 = vpack.c.b16 %v287, %v285
    %v478 = vpack.c.b16 %v288, %v286
    %v479 = vpack.c.b16 %v291, %v289
    %v480 = vpack.c.b16 %v292, %v290
    %v481 = vpack.c.b16 %v295, %v293
    %v482 = vpack.c.b16 %v296, %v294
    %v483 = vpack.c.b16 %v299, %v297
    %v484 = vpack.c.b16 %v300, %v298
    %v485 = vpack.c.b16 %v303, %v301
    %v486 = vpack.c.b16 %v304, %v302
    %v487 = vpack.c.b16 %v307, %v305
    %v488 = vpack.c.b16 %v308, %v306
    %v489 = vpack.c.b16 %v311, %v309
    %v490 = vpack.c.b16 %v312, %v310
    %v491 = vpack.c.b16 %v315, %v313
    %v492 = vpack.c.b16 %v316, %v314
    %v493 = vpack.c.b16 %v319, %v317
    %v494 = vpack.c.b16 %v320, %v318
    %v495 = vpack.c.b16 %v323, %v321
    %v496 = vpack.c.b16 %v324, %v322
    %v497 = vpack.c.b16 %v327, %v325
    %v498 = vpack.c.b16 %v328, %v326
    %v499 = vpack.c.b16 %v331, %v329
    %v500 = vpack.c.b16 %v332, %v330
    %v501 = vpack.c.b16 %v335, %v333
    %v502 = vpack.c.b16 %v336, %v334
    %v503 = vpack.c.b16 %v339, %v337
    %v504 = vpack.c.b16 %v340, %v338
    %v505 = vpack.c.b16 %v343, %v341
    %v506 = vpack.c.b16 %v344, %v342
    %v507 = vpack.c.b16 %v347, %v345
    %v508 = vpack.c.b16 %v348, %v346
    %v509 = vpack.c.b16 %v351, %v349
    %v510 = vpack.c.b16 %v352, %v350
    %v511 = vpack.c.b16 %v355, %v353
    %v512 = vpack.c.b16 %v356, %v354
    %v513 = vpack.c.b16 %v359, %v357
    %v514 = vpack.c.b16 %v360, %v358
    %v515 = vpack.c.b16 %v363, %v361
    %v516 = vpack.c.b16 %v364, %v362
    %v517 = vpack.c.b16 %v367, %v365
    %v518 = vpack.c.b16 %v368, %v366
    %v519 = vpack.c.b16 %v371, %v369
    %v520 = vpack.c.b16 %v372, %v370
    %v521 = vpack.c.b16 %v375, %v373
    %v522 = vpack.c.b16 %v376, %v374
    %v523 = vpack.c.b16 %v379, %v377
    %v524 = vpack.c.b16 %v380, %v378
    %v525 = vpack.c.b16 %v383, %v381
    %v526 = vpack.c.b16 %v384, %v382
    %v527 = vpack.c.b16 %v387, %v385
    %v528 = vpack.c.b16 %v388, %v386
    %v529 = vpack.c.b16 %v391, %v389
    %v530 = vpack.c.b16 %v392, %v390
    %v531 = vpack.c.b16 %v395, %v393
    %v532 = vpack.c.b16 %v396, %v394
    %v533 = vpack.c.b16 %v399, %v397
    %v534 = vpack.c.b16 %v400, %v398
    %v535 = vpack.c.b16 %v403, %v401
    %v536 = vpack.c.b16 %v404, %v402
    %v537 = vpack.c.b16 %v407, %v405
    %v538 = vpack.c.b16 %v408, %v406
    %v539 = vpack.c.b16 %v411, %v409
    %v540 = vpack.c.b16 %v412, %v410
    %v541 = vpack.c.b16 %v415, %v413
    %v542 = vpack.c.b16 %v416, %v414
    %v543 = vpack.c.b16 %v419, %v417
    %v544 = vpack.c.b16 %v420, %v418
    %v545 = vpack.c.b16 %v423, %v421
    %v546 = vpack.c.b16 %v424, %v422
    %v547 = vpack.c.b16 %v427, %v425
    %v548 = vpack.c.b16 %v428, %v426
    %v549 = vpack.c.b16 %v431, %v429
    %v550 = vpack.c.b16 %v432, %v430
    %v551 = vpack.c.b16 %v435, %v433
    %v552 = vpack.c.b16 %v436, %v434
    %v553 = vpack.c.b16 %v439, %v437
    %v554 = vpack.c.b16 %v440, %v438
    %v555 = vpack.c.b16 %v443, %v441
    %v556 = vpack.c.b16 %v444, %v442
    %v557 = vpack.c.b16 %v447, %v445
    %v558 = vpack.c.b16 %v448, %v446
    %v559 = vpack.c.b16 %v451, %v449
    %v560 = vpack.c.b16 %v452, %v450
    %v561 = vpack.c.b16 %v455, %v453
    %v562 = vpack.c.b16 %v456, %v454
    %v563 = vpack.c.b16 %v459, %v457
    %v564 = vpack.c.b16 %v460, %v458
    %v565 = vpack.c.b16 %v463, %v461
    %v566 = vpack.c.b16 %v464, %v462
    %v567 = vpack.c.b16 %v467, %v465
    %v568 = vpack.c.b16 %v468, %v466
    %v569 = vpack.c.b16 %v471, %v469
    %v570 = vpack.c.b16 %v472, %v470
    %vm669 = vcmask 130048
    %v671 = vsel %vm669, %v80, 0
    %673 = vmatprep.subr.bf16.mxu0 %v474
    %674 = vmatpush1.bf16.msra.mxu0 %v473
    %675 = vmatprep.subr.bf16.mxu0 %v476
    %676 = vmatpush1.bf16.msra.mxu0 %v475
    %677 = vmatprep.subr.bf16.mxu0 %v478
    %678 = vmatpush1.bf16.msra.mxu0 %v477
    %679 = vmatprep.subr.bf16.mxu0 %v480
    %680 = vmatpush1.bf16.msra.mxu0 %v479
    %681 = vmatprep.subr.bf16.mxu0 %v482
    %682 = vmatpush1.bf16.msra.mxu0 %v481
    %683 = vmatprep.subr.bf16.mxu0 %v484
    %684 = vmatpush1.bf16.msra.mxu0 %v483
    %685 = vmatprep.subr.bf16.mxu0 %v486
    %686 = vmatpush1.bf16.msra.mxu0 %v485
    %687 = vmatprep.subr.bf16.mxu0 %v488
    %688 = vmatpush1.bf16.msra.mxu0 %v487
    %689 = vmatprep.subr.bf16.mxu0 %v490
    %690 = vmatpush1.bf16.msra.mxu0 %v489
    %691 = vmatprep.subr.bf16.mxu0 %v492
    %692 = vmatpush1.bf16.msra.mxu0 %v491
    %693 = vmatprep.subr.bf16.mxu0 %v494
    %694 = vmatpush1.bf16.msra.mxu0 %v493
    %695 = vmatprep.subr.bf16.mxu0 %v496
    %696 = vmatpush1.bf16.msra.mxu0 %v495
    %697 = vmatprep.subr.bf16.mxu0 %v498
    %698 = vmatpush1.bf16.msra.mxu0 %v497
    %699 = vmatprep.subr.bf16.mxu0 %v500
    %700 = vmatpush1.bf16.msra.mxu0 %v499
    %701 = vmatprep.subr.bf16.mxu0 %v502
    %702 = vmatpush1.bf16.msra.mxu0 %v501
    %703 = vmatprep.subr.bf16.mxu0 %v504
    %704 = vmatpush1.bf16.msra.mxu0 %v503
    %705 = vmatprep.mubr.bf16.mxu0 %v75
    %706 = vmatmul.mubr.bf16.gmra.mrb[0].mxu0 %v74
    %v707 = vpop.f32.mrb[0].mxu0
    %v708 = vadd.f32 0.0, %v707
    %v709 = vpop.f32.mrb[0].mxu0
    %v710 = vadd.f32 0.0, %v709
    %v711 = vpop.f32.mrb[0].mxu0
    %v712 = vadd.f32 0.0, %v711
    %v713 = vpop.f32.mrb[0].mxu0
    %v714 = vadd.f32 0.0, %v713
    %715 = vdwg.mxu0
    %716 = vmatprep.subr.bf16.mxu0 %v506
    %717 = vmatpush1.bf16.msra.mxu0 %v505
    %718 = vmatprep.subr.bf16.mxu0 %v508
    %719 = vmatpush1.bf16.msra.mxu0 %v507
    %720 = vmatprep.subr.bf16.mxu0 %v510
    %721 = vmatpush1.bf16.msra.mxu0 %v509
    %722 = vmatprep.subr.bf16.mxu0 %v512
    %723 = vmatpush1.bf16.msra.mxu0 %v511
    %724 = vmatprep.subr.bf16.mxu0 %v514
    %725 = vmatpush1.bf16.msra.mxu0 %v513
    %726 = vmatprep.subr.bf16.mxu0 %v516
    %727 = vmatpush1.bf16.msra.mxu0 %v515
    %728 = vmatprep.subr.bf16.mxu0 %v518
    %729 = vmatpush1.bf16.msra.mxu0 %v517
    %730 = vmatprep.subr.bf16.mxu0 %v520
    %731 = vmatpush1.bf16.msra.mxu0 %v519
    %732 = vmatprep.subr.bf16.mxu0 %v522
    %733 = vmatpush1.bf16.msra.mxu0 %v521
    %734 = vmatprep.subr.bf16.mxu0 %v524
    %735 = vmatpush1.bf16.msra.mxu0 %v523
    %736 = vmatprep.subr.bf16.mxu0 %v526
    %737 = vmatpush1.bf16.msra.mxu0 %v525
    %738 = vmatprep.subr.bf16.mxu0 %v528
    %739 = vmatpush1.bf16.msra.mxu0 %v527
    %740 = vmatprep.subr.bf16.mxu0 %v530
    %741 = vmatpush1.bf16.msra.mxu0 %v529
    %742 = vmatprep.subr.bf16.mxu0 %v532
    %743 = vmatpush1.bf16.msra.mxu0 %v531
    %744 = vmatprep.subr.bf16.mxu0 %v534
    %745 = vmatpush1.bf16.msra.mxu0 %v533
    %746 = vmatprep.subr.bf16.mxu0 %v536
    %747 = vmatpush1.bf16.msra.mxu0 %v535
    %748 = vmatprep.mubr.bf16.mxu0 %v77
    %749 = vmatmul.mubr.bf16.gmra.mrb[0].mxu0 %v76
    %v750 = vpop.f32.mrb[0].mxu0
    %v751 = vadd.f32 %v708, %v750
    %v752 = vpop.f32.mrb[0].mxu0
    %v753 = vadd.f32 %v710, %v752
    %v754 = vpop.f32.mrb[0].mxu0
    %v755 = vadd.f32 %v712, %v754
    %v756 = vpop.f32.mrb[0].mxu0
    %v757 = vadd.f32 %v714, %v756
    %758 = vdwg.mxu0
    %759 = vmatprep.subr.bf16.mxu0 %v538
    %760 = vmatpush1.bf16.msra.mxu0 %v537
    %761 = vmatprep.subr.bf16.mxu0 %v540
    %762 = vmatpush1.bf16.msra.mxu0 %v539
    %763 = vmatprep.subr.bf16.mxu0 %v542
    %764 = vmatpush1.bf16.msra.mxu0 %v541
    %765 = vmatprep.subr.bf16.mxu0 %v544
    %766 = vmatpush1.bf16.msra.mxu0 %v543
    %767 = vmatprep.subr.bf16.mxu0 %v546
    %768 = vmatpush1.bf16.msra.mxu0 %v545
    %769 = vmatprep.subr.bf16.mxu0 %v548
    %770 = vmatpush1.bf16.msra.mxu0 %v547
    %771 = vmatprep.subr.bf16.mxu0 %v550
    %772 = vmatpush1.bf16.msra.mxu0 %v549
    %773 = vmatprep.subr.bf16.mxu0 %v552
    %774 = vmatpush1.bf16.msra.mxu0 %v551
    %775 = vmatprep.subr.bf16.mxu0 %v554
    %776 = vmatpush1.bf16.msra.mxu0 %v553
    %777 = vmatprep.subr.bf16.mxu0 %v556
    %778 = vmatpush1.bf16.msra.mxu0 %v555
    %779 = vmatprep.subr.bf16.mxu0 %v558
    %780 = vmatpush1.bf16.msra.mxu0 %v557
    %781 = vmatprep.subr.bf16.mxu0 %v560
    %782 = vmatpush1.bf16.msra.mxu0 %v559
    %783 = vmatprep.subr.bf16.mxu0 %v562
    %784 = vmatpush1.bf16.msra.mxu0 %v561
    %785 = vmatprep.subr.bf16.mxu0 %v564
    %786 = vmatpush1.bf16.msra.mxu0 %v563
    %787 = vmatprep.subr.bf16.mxu0 %v566
    %788 = vmatpush1.bf16.msra.mxu0 %v565
    %789 = vmatprep.subr.bf16.mxu0 %v568
    %790 = vmatpush1.bf16.msra.mxu0 %v567
    %791 = vmatprep.mubr.bf16.mxu0 %v79
    %792 = vmatmul.mubr.bf16.gmra.mrb[0].mxu0 %v78
    %v793 = vpop.f32.mrb[0].mxu0
    %v794 = vadd.f32 %v751, %v793
    %v795 = vpop.f32.mrb[0].mxu0
    %v796 = vadd.f32 %v753, %v795
    %v797 = vpop.f32.mrb[0].mxu0
    %v798 = vadd.f32 %v755, %v797
    %v799 = vpop.f32.mrb[0].mxu0
    %v800 = vadd.f32 %v757, %v799
    %801 = vdwg.mxu0
    %802 = vmatprep.subr.bf16.mxu0 %v570
    %803 = vmatpush1.bf16.msra.mxu0 %v569
    %804 = vmatprep.subr.bf16.mxu0 0
    %805 = vmatpush1.bf16.msra.mxu0 0
    %806 = vmatprep.subr.bf16.mxu0 0
    %807 = vmatpush1.bf16.msra.mxu0 0
    %808 = vmatprep.subr.bf16.mxu0 0
    %809 = vmatpush1.bf16.msra.mxu0 0
    %810 = vmatprep.subr.bf16.mxu0 0
    %811 = vmatpush1.bf16.msra.mxu0 0
    %812 = vmatprep.subr.bf16.mxu0 0
    %813 = vmatpush1.bf16.msra.mxu0 0
    %814 = vmatprep.subr.bf16.mxu0 0
    %815 = vmatpush1.bf16.msra.mxu0 0
    %816 = vmatprep.subr.bf16.mxu0 0
    %817 = vmatpush1.bf16.msra.mxu0 0
    %818 = vmatprep.subr.bf16.mxu0 0
    %819 = vmatpush1.bf16.msra.mxu0 0
    %820 = vmatprep.subr.bf16.mxu0 0
    %821 = vmatpush1.bf16.msra.mxu0 0
    %822 = vmatprep.subr.bf16.mxu0 0
    %823 = vmatpush1.bf16.msra.mxu0 0
    %824 = vmatprep.subr.bf16.mxu0 0
    %825 = vmatpush1.bf16.msra.mxu0 0
    %826 = vmatprep.subr.bf16.mxu0 0
    %827 = vmatpush1.bf16.msra.mxu0 0
    %828 = vmatprep.subr.bf16.mxu0 0
    %829 = vmatpush1.bf16.msra.mxu0 0
    %830 = vmatprep.subr.bf16.mxu0 0
    %831 = vmatpush1.bf16.msra.mxu0 0
    %832 = vmatprep.subr.bf16.mxu0 0
    %833 = vmatpush1.bf16.msra.mxu0 0
    %834 = vmatprep.mubr.bf16.mxu0 0
    %835 = vmatmul.mubr.bf16.gmra.mrb[0].mxu0 %v671
    %v836 = vpop.f32.mrb[0].mxu0
    %v837 = vadd.f32 %v794, %v836
    %v838 = vpop.f32.mrb[0].mxu0
    %v839 = vadd.f32 %v796, %v838
    %v840 = vpop.f32.mrb[0].mxu0
    %v841 = vadd.f32 %v798, %v840
    %v842 = vpop.f32.mrb[0].mxu0
    %v843 = vadd.f32 %v800, %v842
    %844 = vdwg.mxu0
    %v845 = vmax.f32 %v837, 0.0
    %v846 = vmax.f32 %v839, 0.0
    %v847 = vmax.f32 %v841, 0.0
    %v848 = vmax.f32 %v843, 0.0
    %v849 = vpack.c.bf16 %v847, %v845
    %v850 = vpack.c.bf16 %v848, %v846
    %v851 = vld [vmem:[#allocation7] sm:$0xf]
    %v852 = vld [vmem:[#allocation7 + $0x4] sm:$0xf]
    %v853 = vld [vmem:[#allocation7 + $0x8] sm:$0xf]
    %v854 = vld [vmem:[#allocation7 + $0xc] sm:$0xf]
    %v855 = vld [vmem:[#allocation7 + $0x10] sm:$0xf]
    %v856 = vld [vmem:[#allocation7 + $0x14] sm:$0xf]
    %v857 = vld [vmem:[#allocation7 + $0x18] sm:$0xf]
    %v858 = vld [vmem:[#allocation7 + $0x1c] sm:$0xf]
    %v859 = vld [vmem:[#allocation7 + $0x20] sm:$0xf]
    %v860 = vld [vmem:[#allocation7 + $0x24] sm:$0xf]
    %v861 = vld [vmem:[#allocation7 + $0x28] sm:$0xf]
    %v862 = vld [vmem:[#allocation7 + $0x2c] sm:$0xf]
    %v863 = vld [vmem:[#allocation7 + $0x30] sm:$0xf]
    %v864 = vld [vmem:[#allocation7 + $0x34] sm:$0xf]
    %v865 = vld [vmem:[#allocation7 + $0x38] sm:$0xf]
    %v866 = vld [vmem:[#allocation7 + $0x3c] sm:$0xf]
    %v867 = vld [vmem:[#allocation7 + $0x40] sm:$0xf]
    %v868 = vld [vmem:[#allocation7 + $0x44] sm:$0xf]
    %v869 = vld [vmem:[#allocation7 + $0x48] sm:$0xf]
    %v870 = vld [vmem:[#allocation7 + $0x4c] sm:$0xf]
    %v871 = vld [vmem:[#allocation7 + $0x50] sm:$0xf]
    %v872 = vld [vmem:[#allocation7 + $0x54] sm:$0xf]
    %v873 = vld [vmem:[#allocation7 + $0x58] sm:$0xf]
    %v874 = vld [vmem:[#allocation7 + $0x5c] sm:$0xf]
    %v875 = vld [vmem:[#allocation7 + $0x60] sm:$0xf]
    %v876 = vld [vmem:[#allocation7 + $0x64] sm:$0xf]
    %v877 = vld [vmem:[#allocation7 + $0x68] sm:$0xf]
    %v878 = vld [vmem:[#allocation7 + $0x6c] sm:$0xf]
    %v879 = vld [vmem:[#allocation7 + $0x70] sm:$0xf]
    %v880 = vld [vmem:[#allocation7 + $0x74] sm:$0xf]
    %v881 = vld [vmem:[#allocation7 + $0x78] sm:$0xf]
    %v882 = vld [vmem:[#allocation7 + $0x7c] sm:$0xf]
    %v883 = vld [vmem:[%s3] sm:$0x1]
    %v885 = vlaneseq
    %v886 = vshrl.u32 %v885, 7
    %v887 = vsub.s32 0, %v886
    %v888 = vrot.slane %v883, %v887
    %v922 = vunpack.c.l.b16 %v851
    %v923 = vunpack.c.l.b16 %v852
    %v924 = vunpack.c.l.b16 %v853
    %v925 = vunpack.c.l.b16 %v854
    %v926 = vunpack.c.l.b16 %v855
    %v927 = vunpack.c.l.b16 %v856
    %v928 = vunpack.c.l.b16 %v857
    %v929 = vunpack.c.l.b16 %v858
    %v930 = vunpack.c.l.b16 %v859
    %v931 = vunpack.c.l.b16 %v860
    %v932 = vunpack.c.l.b16 %v861
    %v933 = vunpack.c.l.b16 %v862
    %v934 = vunpack.c.l.b16 %v863
    %v935 = vunpack.c.l.b16 %v864
    %v936 = vunpack.c.l.b16 %v865
    %v937 = vunpack.c.l.b16 %v866
    %v938 = vunpack.c.l.b16 %v867
    %v939 = vunpack.c.l.b16 %v868
    %v940 = vunpack.c.l.b16 %v869
    %v941 = vunpack.c.l.b16 %v870
    %v942 = vunpack.c.l.b16 %v871
    %v943 = vunpack.c.l.b16 %v872
    %v944 = vunpack.c.l.b16 %v873
    %v945 = vunpack.c.l.b16 %v874
    %v946 = vunpack.c.l.b16 %v875
    %v947 = vunpack.c.l.b16 %v876
    %v948 = vunpack.c.l.b16 %v877
    %v949 = vunpack.c.l.b16 %v878
    %v950 = vunpack.c.l.b16 %v879
    %v951 = vunpack.c.l.b16 %v880
    %v952 = vunpack.c.l.b16 %v881
    %v953 = vunpack.c.l.b16 %v882
    %v954 = vpack.c.b16 %v923, %v922
    %v955 = vpack.c.b16 %v925, %v924
    %v956 = vpack.c.b16 %v927, %v926
    %v957 = vpack.c.b16 %v929, %v928
    %v958 = vpack.c.b16 %v931, %v930
    %v959 = vpack.c.b16 %v933, %v932
    %v960 = vpack.c.b16 %v935, %v934
    %v961 = vpack.c.b16 %v937, %v936
    %v962 = vpack.c.b16 %v939, %v938
    %v963 = vpack.c.b16 %v941, %v940
    %v964 = vpack.c.b16 %v943, %v942
    %v965 = vpack.c.b16 %v945, %v944
    %v966 = vpack.c.b16 %v947, %v946
    %v967 = vpack.c.b16 %v949, %v948
    %v968 = vpack.c.b16 %v951, %v950
    %v969 = vpack.c.b16 %v953, %v952
    %986 = vmatprep.subr.bf16.mxu0 0
    %987 = vmatpush1.bf16.msra.mxu0 %v954
    %988 = vmatprep.subr.bf16.mxu0 0
    %989 = vmatpush1.bf16.msra.mxu0 %v955
    %990 = vmatprep.subr.bf16.mxu0 0
    %991 = vmatpush1.bf16.msra.mxu0 %v956
    %992 = vmatprep.subr.bf16.mxu0 0
    %993 = vmatpush1.bf16.msra.mxu0 %v957
    %994 = vmatprep.subr.bf16.mxu0 0
    %995 = vmatpush1.bf16.msra.mxu0 %v958
    %996 = vmatprep.subr.bf16.mxu0 0
    %997 = vmatpush1.bf16.msra.mxu0 %v959
    %998 = vmatprep.subr.bf16.mxu0 0
    %999 = vmatpush1.bf16.msra.mxu0 %v960
    %1000 = vmatprep.subr.bf16.mxu0 0
    %1001 = vmatpush1.bf16.msra.mxu0 %v961
    %1002 = vmatprep.subr.bf16.mxu0 0
    %1003 = vmatpush1.bf16.msra.mxu0 %v962
    %1004 = vmatprep.subr.bf16.mxu0 0
    %1005 = vmatpush1.bf16.msra.mxu0 %v963
    %1006 = vmatprep.subr.bf16.mxu0 0
    %1007 = vmatpush1.bf16.msra.mxu0 %v964
    %1008 = vmatprep.subr.bf16.mxu0 0
    %1009 = vmatpush1.bf16.msra.mxu0 %v965
    %1010 = vmatprep.subr.bf16.mxu0 0
    %1011 = vmatpush1.bf16.msra.mxu0 %v966
    %1012 = vmatprep.subr.bf16.mxu0 0
    %1013 = vmatpush1.bf16.msra.mxu0 %v967
    %1014 = vmatprep.subr.bf16.mxu0 0
    %1015 = vmatpush1.bf16.msra.mxu0 %v968
    %1016 = vmatprep.subr.bf16.mxu0 0
    %1017 = vmatpush1.bf16.msra.mxu0 %v969
    %1018 = vmatprep.mubr.bf16.mxu0 %v850
    %1019 = vmatmul.mubr.bf16.gmra.mrb[0].mxu0 %v849
    %v1020 = vpop.f32.mrb[0].mxu0
    %v1021 = vadd.f32 %v888, %v1020
    %v1022 = vpop.f32.mrb[0].mxu0
    %v1023 = vpop.f32.mrb[0].mxu0
    %v1024 = vadd.f32 %v888, %v1023
    %v1025 = vpop.f32.mrb[0].mxu0
    %1026 = vdwg.mxu0
    %1027 = vmax.xlane.f32.xlu0 %v1021
    %v1028 = vpop.xlane.xlu0 %1027
    %1029 = vmax.xlane.f32.xlu0 %v1024
    %v1030 = vpop.xlane.xlu0 %1029
    %v1031 = vsub.f32 %v1021, %v1028
    %v1032 = vsub.f32 %v1024, %v1030
    %v1033 = vmul.f32 %v1031, 1.442695
    %v1034 = vpow.pop %v1033
    %v1035 = vmul.f32 %v1032, 1.442695
    %v1036 = vpow.pop %v1035
    %1037 = vadd.xlane.f32.xlu0 %v1034
    %v1038 = vpop.xlane.xlu0 %1037
    %1039 = vadd.xlane.f32.xlu0 %v1036
    %v1040 = vpop.xlane.xlu0 %1039
    %v1041 = vrcp.pop %v1038
    %v1042 = vmul.f32 %v1034, %v1041
    %v1043 = vrcp.pop %v1040
    %v1044 = vmul.f32 %v1036, %v1043
    %1045 = vst [vmem:[#allocation8] sm:$0xff] %v1042
    %1046 = vst [vmem:[#allocation8 + $0x8] sm:$0xff] %v1044
    // Predicated region
    $region30: #{tpu_custom_call.1} parent=1 // pred_check
      _
    $region31: #{tpu_custom_call.1} parent=1 // pred_check_branch
      %1048 = sbr.rel (0) target = $region33
    $region32: #{tpu_custom_call.1} parent=1 // pred_region
      %s1050 = ssub.s32 256, 256
      %1051 = vsyncadd [#allocation4], %s1050
      %s1052 = sshll.u32 [#allocation8], 4
      %s1053 = int_to_ptr.vmem [resolvable:$true] %s1052
      %1058 = dma.vmem_to_hbm [thread:$0]  %s1053, 256, %s4, [#allocation4], 128, 128, 8
    $region33: #{tpu_custom_call.1} parent=1 // pred_fallthru
      _
    // Predicated region
    $region34: #{tpu_custom_call.1} parent=1 // pred_check
      _
    $region35: #{tpu_custom_call.1} parent=1 // pred_check_branch
      %1060 = sbr.rel (0) target = $region37
    $region36: #{tpu_custom_call.1} parent=1 // pred_region
      %1061 = dma.done [#allocation4], 256
    $region37: #{tpu_custom_call.1} parent=1 // pred_fallthru
      _
    %1062 = vsyncpa [#allocation3], 1
    %1063 = vsyncpa [#allocation6], 1
    %1064 = vsyncpa [#allocation4], 1

</llo_original>
